<compile_context>
chip_gen: v6e
topology: v6e:2x2x1
jax: 0.10.0
libtpu: 0.0.40
codegen_flags: <defaults>
</compile_context>

<pallas_src>
import functools

import jax
import jax.numpy as jnp
from jax import lax
from jax.experimental import pallas as pl
from jax.experimental.pallas import tpu as pltpu


def _round_up(x, m):
    return ((x + m - 1) // m) * m


def _v2e_theta_kernel(h_ref, x_ref, inv_de_ref, w_ref, b_ref, y_ref, acc_ref):
    # Accumulate Z = H^T @ X across the N (reduction) grid axis.
    @pl.when(pl.program_id(0) == 0)
    def _():
        acc_ref[...] = jnp.zeros_like(acc_ref)

    # Contract over the vertex (row) axis of both tiles -> (E_p, Din_p).
    # This feeds H to the MXU with a transposed contraction instead of an
    # explicit XLU transpose of the whole H tile.
    acc_ref[...] += lax.dot_general(
        h_ref[...], x_ref[...],
        dimension_numbers=(((0,), (0,)), ((), ())),
        preferred_element_type=jnp.float32)

    @pl.when(pl.program_id(0) == pl.num_programs(0) - 1)
    def _():
        z = acc_ref[...] * inv_de_ref[...]                 # per-edge mean (E_p, Din_p)
        y = jnp.dot(z.astype(jnp.bfloat16), w_ref[...],
                    preferred_element_type=jnp.float32) + b_ref[...]
        y_ref[...] = y.astype(y_ref.dtype)


def _e2v_relu_kernel(h_ref, y_ref, inv_dv_ref, out_ref):
    xv = jnp.dot(h_ref[...], y_ref[...], preferred_element_type=jnp.float32)
    xv = xv * inv_dv_ref[...]                              # per-vertex mean
    # ReLU; Dropout is the identity in eval mode.
    # TODO(synk): training-mode dropout would need pltpu.prng_seed/prng_random_bits masking.
    out_ref[...] = jnp.maximum(xv, 0.0).astype(out_ref.dtype)


@functools.partial(jax.jit, static_argnames=("tile_n",))
def hypergraph_conv(x, w, b, h, *, tile_n=256):
    """x:(N,Din), w:(Din,Dout), b:(Dout,), h:(N,E) 0/1 incidence -> (N,Dout)."""
    n, din = x.shape
    dout = w.shape[1]
    e = h.shape[1]

    din_p = _round_up(din, 128)
    dout_p = _round_up(dout, 128)
    e_p = _round_up(e, 128)
    tn = tile_n if n >= tile_n else _round_up(max(n, 8), 8)
    n_p = _round_up(n, tn)
    grid_n = n_p // tn

    # bf16 MXU operands (H is 0/1 so exact), zero-padded to lane-dense tiles.
    x_p = jnp.zeros((n_p, din_p), jnp.bfloat16).at[:n, :din].set(
        x.astype(jnp.bfloat16))
    h_p = jnp.zeros((n_p, e_p), jnp.bfloat16).at[:n, :e].set(
        h.astype(jnp.bfloat16))
    w_p = jnp.zeros((din_p, dout_p), jnp.bfloat16).at[:din, :dout].set(
        w.astype(jnp.bfloat16))
    b_p = jnp.zeros((1, dout_p), jnp.float32).at[0, :dout].set(
        b.astype(jnp.float32))

    # Exact f32 reciprocal degrees, precomputed once (zero on padded rows/cols,
    # so padded edges/vertices contribute nothing).
    h_f = h.astype(jnp.float32)
    inv_de = jnp.zeros((e_p, 1), jnp.float32).at[:e, 0].set(
        1.0 / jnp.maximum(h_f.sum(0), 1.0))
    inv_dv = jnp.zeros((n_p, 1), jnp.float32).at[:n, 0].set(
        1.0 / jnp.maximum(h_f.sum(1), 1.0))

    # Pass 1: Y = ((H^T X)/de) W + b, reduced over N-row tiles.
    y = pl.pallas_call(
        _v2e_theta_kernel,
        out_shape=jax.ShapeDtypeStruct((e_p, dout_p), jnp.bfloat16),
        grid_spec=pltpu.PrefetchScalarGridSpec(
            num_scalar_prefetch=0,
            grid=(grid_n,),
            in_specs=[
                pl.BlockSpec((tn, e_p), lambda i: (i, 0)),         # H tile
                pl.BlockSpec((tn, din_p), lambda i: (i, 0)),       # X tile
                pl.BlockSpec((e_p, 1), lambda i: (0, 0)),          # 1/de (resident)
                pl.BlockSpec((din_p, dout_p), lambda i: (0, 0)),   # W (resident)
                pl.BlockSpec((1, dout_p), lambda i: (0, 0)),       # b (resident)
            ],
            out_specs=pl.BlockSpec((e_p, dout_p), lambda i: (0, 0)),
            scratch_shapes=[pltpu.VMEM((e_p, din_p), jnp.float32)],
        ),
        compiler_params=pltpu.CompilerParams(
            dimension_semantics=("arbitrary",)),
    )(h_p, x_p, inv_de, w_p, b_p)

    # Pass 2: out = ReLU((H Y)/dv), independent N-row tiles (megacore parallel).
    out_p = pl.pallas_call(
        _e2v_relu_kernel,
        out_shape=jax.ShapeDtypeStruct((n_p, dout_p), jnp.float32),
        grid_spec=pltpu.PrefetchScalarGridSpec(
            num_scalar_prefetch=0,
            grid=(grid_n,),
            in_specs=[
                pl.BlockSpec((tn, e_p), lambda i: (i, 0)),         # H tile
                pl.BlockSpec((e_p, dout_p), lambda i: (0, 0)),     # Y (resident)
                pl.BlockSpec((tn, 1), lambda i: (i, 0)),           # 1/dv tile
            ],
            out_specs=pl.BlockSpec((tn, dout_p), lambda i: (i, 0)),
        ),
        compiler_params=pltpu.CompilerParams(
            dimension_semantics=("parallel",)),
    )(h_p, y, inv_dv)

    return out_p[:n, :dout]


def reference(x, w, b, h):
    xw = x @ w + b[None, :]
    de = jnp.maximum(h.sum(0), 1.0)
    y = (h.T @ xw) / de[:, None]
    dv = jnp.maximum(h.sum(1), 1.0)
    xv = (h @ y) / dv[:, None]
    return jnp.maximum(xv, 0.0)


if __name__ == "__main__":
    key = jax.random.PRNGKey(0)
    k_x, k_w, k_b, k_h = jax.random.split(key, 4)

    N, E = 16, 8          # vertices, hyperedges
    Din, Dout = 32, 32    # input / output feature dims

    x = jax.random.normal(k_x, (N, Din), dtype=jnp.float32)

    # PyTorch nn.Linear default init: U(-1/sqrt(Din), 1/sqrt(Din))
    bound = 1.0 / (Din ** 0.5)
    w = jax.random.uniform(k_w, (Din, Dout), minval=-bound, maxval=bound,
                           dtype=jnp.float32)
    b = jax.random.uniform(k_b, (Dout,), minval=-bound, maxval=bound,
                           dtype=jnp.float32)

    # Deterministic random incidence matrix (each entry ~ Bernoulli(0.3))
    h = (jax.random.uniform(k_h, (N, E)) < 0.3).astype(jnp.float32)

    out = hypergraph_conv(x, w, b, h)
    out = jax.block_until_ready(out)

    ref = reference(x, w, b, h)
    assert out.shape == ref.shape, "shape mismatch vs reference"
    # bf16 MXU inputs with f32 accumulation -> relaxed tolerance vs f32 reference.
    assert jnp.allclose(out, ref, atol=3e-2, rtol=3e-2), "mismatch vs reference"

    print("KERNEL_OK")
</pallas_src>

<mosaic_0001>
module attributes {stable_mosaic.version = 11 : i64} {
  func.func @_v2e_theta_kernel(%arg0: i32, %arg1: memref<16x128xbf16, #tpu.memory_space<vmem>>, %arg2: memref<16x128xbf16, #tpu.memory_space<vmem>>, %arg3: memref<128x1xf32, #tpu.memory_space<vmem>>, %arg4: memref<128x128xbf16, #tpu.memory_space<vmem>>, %arg5: memref<1x128xf32, #tpu.memory_space<vmem>>, %arg6: memref<128x128xbf16, #tpu.memory_space<vmem>>, %arg7: memref<128x128xf32, #tpu.memory_space<vmem>>) attributes {dimension_semantics = [#tpu.dimension_semantics<arbitrary>], iteration_bounds = array<i64: 1>, scalar_prefetch = 0 : i64, scratch_operands = 1 : i64, tpu.core_type = #tpu.core_type<tc>, window_params = [{transform_indices = @transform_0, window_bounds = array<i64: 16, 128>}, {transform_indices = @transform_1, window_bounds = array<i64: 16, 128>}, {pipeline_mode = #tpu.pipeline_mode<synchronous>, transform_indices = @transform_2, window_bounds = array<i64: 128, 1>}, {pipeline_mode = #tpu.pipeline_mode<synchronous>, transform_indices = @transform_3, window_bounds = array<i64: 128, 128>}, {pipeline_mode = #tpu.pipeline_mode<synchronous>, transform_indices = @transform_4, window_bounds = array<i64: 1, 128>}, {pipeline_mode = #tpu.pipeline_mode<synchronous>, transform_indices = @transform_5, window_bounds = array<i64: 128, 128>}]} {
    %c0_i32 = arith.constant 0 : i32
    %0 = arith.cmpi eq, %arg0, %c0_i32 : i32
    %1 = arith.extui %0 : i1 to i32
    %c0_i32_0 = arith.constant 0 : i32
    %2 = arith.cmpi ne, %1, %c0_i32_0 : i32
    scf.if %2 {
      %cst_10 = arith.constant 0.000000e+00 : f32
      %12 = vector.broadcast %cst_10 : f32 to vector<128x128xf32>
      %c0_11 = arith.constant 0 : index
      %c0_12 = arith.constant 0 : index
      %13 = vector.load %arg7[%c0_11, %c0_12] : memref<128x128xf32, #tpu.memory_space<vmem>>, vector<128x128xf32>
      tpu.vector_store %arg7[%c0_11, %c0_12], %12 {strides = array<i32>} : memref<128x128xf32, #tpu.memory_space<vmem>>, vector<128x128xf32>,
    } else {
    }
    %c0 = arith.constant 0 : index
    %c0_1 = arith.constant 0 : index
    %3 = vector.load %arg7[%c0, %c0_1] : memref<128x128xf32, #tpu.memory_space<vmem>>, vector<128x128xf32>
    %c0_2 = arith.constant 0 : index
    %c0_3 = arith.constant 0 : index
    %4 = vector.load %arg1[%c0_2, %c0_3] : memref<16x128xbf16, #tpu.memory_space<vmem>>, vector<16x128xbf16>
    %c0_4 = arith.constant 0 : index
    %c0_5 = arith.constant 0 : index
    %5 = vector.load %arg2[%c0_4, %c0_5] : memref<16x128xbf16, #tpu.memory_space<vmem>>, vector<16x128xbf16>
    %cst = arith.constant dense<0.000000e+00> : vector<128x128xf32>
    %6 = tpu.matmul %4, %5, %cst {dimension_numbers = #tpu.dot_dimension_numbers<[0], [0], [1], [1], [0, 1, 1, 1], [], []>} : vector<16x128xbf16>, vector<16x128xbf16>, vector<128x128xf32> -> vector<128x128xf32>
    %7 = arith.addf %3, %6 : vector<128x128xf32>
    %c0_6 = arith.constant 0 : index
    %c0_7 = arith.constant 0 : index
    %8 = vector.load %arg7[%c0_6, %c0_7] : memref<128x128xf32, #tpu.memory_space<vmem>>, vector<128x128xf32>
    tpu.vector_store %arg7[%c0_6, %c0_7], %7 {strides = array<i32>} : memref<128x128xf32, #tpu.memory_space<vmem>>, vector<128x128xf32>,
    %c0_i32_8 = arith.constant 0 : i32
    %9 = arith.cmpi eq, %arg0, %c0_i32_8 : i32
    %10 = arith.extui %9 : i1 to i32
    %c0_i32_9 = arith.constant 0 : i32
    %11 = arith.cmpi ne, %10, %c0_i32_9 : i32
    scf.if %11 {
      %c0_10 = arith.constant 0 : index
      %c0_11 = arith.constant 0 : index
      %12 = vector.load %arg7[%c0_10, %c0_11] : memref<128x128xf32, #tpu.memory_space<vmem>>, vector<128x128xf32>
      %c0_12 = arith.constant 0 : index
      %c0_13 = arith.constant 0 : index
      %13 = vector.load %arg3[%c0_12, %c0_13] : memref<128x1xf32, #tpu.memory_space<vmem>>, vector<128x1xf32>
      %14 = vector.broadcast %13 : vector<128x1xf32> to vector<128x128xf32>
      %15 = arith.mulf %12, %14 : vector<128x128xf32>
      %16 = arith.truncf %15 : vector<128x128xf32> to vector<128x128xbf16>
      %c0_14 = arith.constant 0 : index
      %c0_15 = arith.constant 0 : index
      %17 = vector.load %arg4[%c0_14, %c0_15] : memref<128x128xbf16, #tpu.memory_space<vmem>>, vector<128x128xbf16>
      %cst_16 = arith.constant dense<0.000000e+00> : vector<128x128xf32>
      %18 = tpu.matmul %16, %17, %cst_16 {dimension_numbers = #tpu.dot_dimension_numbers<[1], [0], [0], [1], [0, 0, 1, 1], [], []>} : vector<128x128xbf16>, vector<128x128xbf16>, vector<128x128xf32> -> vector<128x128xf32>
      %c0_17 = arith.constant 0 : index
      %c0_18 = arith.constant 0 : index
      %19 = vector.load %arg5[%c0_17, %c0_18] : memref<1x128xf32, #tpu.memory_space<vmem>>, vector<1x128xf32>
      %20 = vector.broadcast %19 : vector<1x128xf32> to vector<128x128xf32>
      %21 = arith.addf %18, %20 : vector<128x128xf32>
      %22 = arith.truncf %21 : vector<128x128xf32> to vector<128x128xbf16>
      %c0_19 = arith.constant 0 : index
      %c0_20 = arith.constant 0 : index
      %23 = vector.load %arg6[%c0_19, %c0_20] : memref<128x128xbf16, #tpu.memory_space<vmem>>, vector<128x128xbf16>
      tpu.vector_store %arg6[%c0_19, %c0_20], %22 {strides = array<i32>} : memref<128x128xbf16, #tpu.memory_space<vmem>>, vector<128x128xbf16>,
    } else {
    }
    return
  }
  func.func @transform_0(%arg0: i32) -> (i32, i32) {
    %c0_i32 = arith.constant 0 : i32
    %c0_i32_0 = arith.constant 0 : i32
    return %arg0, %c0_i32 : i32, i32
  }
  func.func @transform_1(%arg0: i32) -> (i32, i32) {
    %c0_i32 = arith.constant 0 : i32
    %c0_i32_0 = arith.constant 0 : i32
    return %arg0, %c0_i32 : i32, i32
  }
  func.func @transform_2(%arg0: i32) -> (i32, i32) {
    %c0_i32 = arith.constant 0 : i32
    %c0_i32_0 = arith.constant 0 : i32
    %c0_i32_1 = arith.constant 0 : i32
    return %c0_i32, %c0_i32_0 : i32, i32
  }
  func.func @transform_3(%arg0: i32) -> (i32, i32) {
    %c0_i32 = arith.constant 0 : i32
    %c0_i32_0 = arith.constant 0 : i32
    %c0_i32_1 = arith.constant 0 : i32
    return %c0_i32, %c0_i32_0 : i32, i32
  }
  func.func @transform_4(%arg0: i32) -> (i32, i32) {
    %c0_i32 = arith.constant 0 : i32
    %c0_i32_0 = arith.constant 0 : i32
    %c0_i32_1 = arith.constant 0 : i32
    return %c0_i32, %c0_i32_0 : i32, i32
  }
  func.func @transform_5(%arg0: i32) -> (i32, i32) {
    %c0_i32 = arith.constant 0 : i32
    %c0_i32_0 = arith.constant 0 : i32
    %c0_i32_1 = arith.constant 0 : i32
    return %c0_i32, %c0_i32_0 : i32, i32
  }
}

module attributes {stable_mosaic.version = 11 : i64} {
  func.func @_e2v_relu_kernel(%arg0: i32, %arg1: memref<16x128xbf16, #tpu.memory_space<vmem>>, %arg2: memref<128x128xbf16, #tpu.memory_space<vmem>>, %arg3: memref<16x1xf32, #tpu.memory_space<vmem>>, %arg4: memref<16x128xf32, #tpu.memory_space<vmem>>) attributes {dimension_semantics = [#tpu.dimension_semantics<parallel>], iteration_bounds = array<i64: 1>, scalar_prefetch = 0 : i64, scratch_operands = 0 : i64, tpu.core_type = #tpu.core_type<tc>, window_params = [{transform_indices = @transform_0, window_bounds = array<i64: 16, 128>}, {pipeline_mode = #tpu.pipeline_mode<synchronous>, transform_indices = @transform_1, window_bounds = array<i64: 128, 128>}, {transform_indices = @transform_2, window_bounds = array<i64: 16, 1>}, {transform_indices = @transform_3, window_bounds = array<i64: 16, 128>}]} {
    %c0 = arith.constant 0 : index
    %c0_0 = arith.constant 0 : index
    %0 = vector.load %arg1[%c0, %c0_0] : memref<16x128xbf16, #tpu.memory_space<vmem>>, vector<16x128xbf16>
    %c0_1 = arith.constant 0 : index
    %c0_2 = arith.constant 0 : index
    %1 = vector.load %arg2[%c0_1, %c0_2] : memref<128x128xbf16, #tpu.memory_space<vmem>>, vector<128x128xbf16>
    %cst = arith.constant dense<0.000000e+00> : vector<16x128xf32>
    %2 = tpu.matmul %0, %1, %cst {dimension_numbers = #tpu.dot_dimension_numbers<[1], [0], [0], [1], [0, 0, 1, 1], [], []>} : vector<16x128xbf16>, vector<128x128xbf16>, vector<16x128xf32> -> vector<16x128xf32>
    %c0_3 = arith.constant 0 : index
    %c0_4 = arith.constant 0 : index
    %3 = vector.load %arg3[%c0_3, %c0_4] : memref<16x1xf32, #tpu.memory_space<vmem>>, vector<16x1xf32>
    %4 = vector.broadcast %3 : vector<16x1xf32> to vector<16x128xf32>
    %5 = arith.mulf %2, %4 : vector<16x128xf32>
    %cst_5 = arith.constant 0.000000e+00 : f32
    %6 = vector.broadcast %cst_5 : f32 to vector<16x128xf32>
    %7 = arith.maximumf %5, %6 : vector<16x128xf32>
    %c0_6 = arith.constant 0 : index
    %c0_7 = arith.constant 0 : index
    %8 = vector.load %arg4[%c0_6, %c0_7] : memref<16x128xf32, #tpu.memory_space<vmem>>, vector<16x128xf32>
    tpu.vector_store %arg4[%c0_6, %c0_7], %7 {strides = array<i32>} : memref<16x128xf32, #tpu.memory_space<vmem>>, vector<16x128xf32>,
    return
  }
  func.func @transform_0(%arg0: i32) -> (i32, i32) {
    %c0_i32 = arith.constant 0 : i32
    %c0_i32_0 = arith.constant 0 : i32
    return %arg0, %c0_i32 : i32, i32
  }
  func.func @transform_1(%arg0: i32) -> (i32, i32) {
    %c0_i32 = arith.constant 0 : i32
    %c0_i32_0 = arith.constant 0 : i32
    %c0_i32_1 = arith.constant 0 : i32
    return %c0_i32, %c0_i32_0 : i32, i32
  }
  func.func @transform_2(%arg0: i32) -> (i32, i32) {
    %c0_i32 = arith.constant 0 : i32
    %c0_i32_0 = arith.constant 0 : i32
    return %arg0, %c0_i32 : i32, i32
  }
  func.func @transform_3(%arg0: i32) -> (i32, i32) {
    %c0_i32 = arith.constant 0 : i32
    %c0_i32_0 = arith.constant 0 : i32
    return %arg0, %c0_i32 : i32, i32
  }
}

</mosaic_0001>

<llo_original>
// kernel: hypergraph_conv.3
$region0: #{hypergraph_conv.3}
  #allocation0 [shape = 'u32[]', space=smem, size = 0x4, offset = 0x4, fixed_abs, tag = 'smem constant byte address 0x4 - core index']
  #allocation1 [shape = 'u32[144,128]{1,0:T(1,128)}', space=vmem, size = 0x12000, scoped, tag = 'internal scratch']
  %s0 = inlined_call_operand.vmem [shape: bf16[16,128], index: 0, kind: input, shape index: {}]
  %s1 = inlined_call_operand.vmem [shape: bf16[128,128], index: 1, kind: input, shape index: {}]
  %s2 = inlined_call_operand.vmem [shape: f32[16,1], index: 2, kind: input, shape index: {}]
  %s3 = inlined_call_operand.hbm [shape: f32[16,128], index: 3, kind: output, shape index: {}]
  %s4 = sld [smem:[#allocation0]]
  $region22: #{hypergraph_conv.3} parent=0
    _
  %s6 = ssub.s32 1, %s4
  %s7 = scalar_select 0, %s6, %s4
  $region1: #{hypergraph_conv.3} parent=0
    #allocation2 [shape = 'u8[8192]{0}', space=vmem, size = 0x2000, scoped, tag = 'output window, operand 0, single buffered']
    #allocation3 [shape = 's32[1]{0}', space=sflag, size = 0x4, scoped, tag = 'scoped memory for hypergraph_conv.3']
    %8 = vsyncpa [#allocation3], 0
    // Predicated region
    $region2: #{hypergraph_conv.3} parent=1 // pred_check
      _
    $region3: #{hypergraph_conv.3} parent=1 // pred_check_branch
      %10 = sbr.rel (0) target = $region5
    $region4: #{hypergraph_conv.3} parent=1 // pred_region
      _
    $region5: #{hypergraph_conv.3} parent=1 // pred_fallthru
      _
    // Predicated region
    $region6: #{hypergraph_conv.3} parent=1 // pred_check
      _
    $region7: #{hypergraph_conv.3} parent=1 // pred_check_branch
      %12 = sbr.rel (0) target = $region9
    $region8: #{hypergraph_conv.3} parent=1 // pred_region
      _
    $region9: #{hypergraph_conv.3} parent=1 // pred_fallthru
      _
    // Predicated region
    $region10: #{hypergraph_conv.3} parent=1 // pred_check
      _
    $region11: #{hypergraph_conv.3} parent=1 // pred_check_branch
      %14 = sbr.rel (0) target = $region13
    $region12: #{hypergraph_conv.3} parent=1 // pred_region
      _
    $region13: #{hypergraph_conv.3} parent=1 // pred_fallthru
      _
    %v16 = vld [vmem:[%s0] sm:$0xf]
    %v17 = vld [vmem:[%s0 + $0x4] sm:$0xf]
    %v18 = vld [vmem:[%s1] sm:$0xf]
    %v19 = vld [vmem:[%s1 + $0x4] sm:$0xf]
    %v20 = vld [vmem:[%s1 + $0x8] sm:$0xf]
    %v21 = vld [vmem:[%s1 + $0xc] sm:$0xf]
    %v22 = vld [vmem:[%s1 + $0x10] sm:$0xf]
    %v23 = vld [vmem:[%s1 + $0x14] sm:$0xf]
    %v24 = vld [vmem:[%s1 + $0x18] sm:$0xf]
    %v25 = vld [vmem:[%s1 + $0x1c] sm:$0xf]
    %v26 = vld [vmem:[%s1 + $0x20] sm:$0xf]
    %v27 = vld [vmem:[%s1 + $0x24] sm:$0xf]
    %v28 = vld [vmem:[%s1 + $0x28] sm:$0xf]
    %v29 = vld [vmem:[%s1 + $0x2c] sm:$0xf]
    %v30 = vld [vmem:[%s1 + $0x30] sm:$0xf]
    %v31 = vld [vmem:[%s1 + $0x34] sm:$0xf]
    %v32 = vld [vmem:[%s1 + $0x38] sm:$0xf]
    %v33 = vld [vmem:[%s1 + $0x3c] sm:$0xf]
    %v36 = vunpack.c.l.b16 %v16
    %v37 = vunpack.c.l.b16 %v17
    %v38 = vpack.c.b16 %v37, %v36
    %v56 = vunpack.c.l.b16 %v18
    %v57 = vunpack.c.l.b16 %v19
    %v58 = vunpack.c.l.b16 %v20
    %v59 = vunpack.c.l.b16 %v21
    %v60 = vunpack.c.l.b16 %v22
    %v61 = vunpack.c.l.b16 %v23
    %v62 = vunpack.c.l.b16 %v24
    %v63 = vunpack.c.l.b16 %v25
    %v64 = vunpack.c.l.b16 %v26
    %v65 = vunpack.c.l.b16 %v27
    %v66 = vunpack.c.l.b16 %v28
    %v67 = vunpack.c.l.b16 %v29
    %v68 = vunpack.c.l.b16 %v30
    %v69 = vunpack.c.l.b16 %v31
    %v70 = vunpack.c.l.b16 %v32
    %v71 = vunpack.c.l.b16 %v33
    %v72 = vpack.c.b16 %v57, %v56
    %v73 = vpack.c.b16 %v59, %v58
    %v74 = vpack.c.b16 %v61, %v60
    %v75 = vpack.c.b16 %v63, %v62
    %v76 = vpack.c.b16 %v65, %v64
    %v77 = vpack.c.b16 %v67, %v66
    %v78 = vpack.c.b16 %v69, %v68
    %v79 = vpack.c.b16 %v71, %v70
    %88 = vmatprep.subr.bf16.mxu0 0
    %89 = vmatpush1.bf16.msra.mxu0 %v79
    %90 = vmatprep.subr.bf16.mxu0 0
    %91 = vmatpush1.bf16.msra.mxu0 %v78
    %92 = vmatprep.subr.bf16.mxu0 0
    %93 = vmatpush1.bf16.msra.mxu0 %v77
    %94 = vmatprep.subr.bf16.mxu0 0
    %95 = vmatpush1.bf16.msra.mxu0 %v76
    %96 = vmatprep.subr.bf16.mxu0 0
    %97 = vmatpush1.bf16.msra.mxu0 %v75
    %98 = vmatprep.subr.bf16.mxu0 0
    %99 = vmatpush1.bf16.msra.mxu0 %v74
    %100 = vmatprep.subr.bf16.mxu0 0
    %101 = vmatpush1.bf16.msra.mxu0 %v73
    %102 = vmatprep.subr.bf16.mxu0 0
    %103 = vmatpush1.bf16.msra.mxu0 %v72
    %104 = vmatprep.subr.bf16.mxu0 0
    %105 = vmatpush2.bf16.msra.mxu0 0
    %106 = vmatprep.subr.bf16.mxu0 0
    %107 = vmatpush2.bf16.msra.mxu0 0
    %108 = vmatprep.subr.bf16.mxu0 0
    %109 = vmatpush2.bf16.msra.mxu0 0
    %110 = vmatprep.subr.bf16.mxu0 0
    %111 = vmatpush2.bf16.msra.mxu0 0
    %112 = vmatprep.subr.bf16.mxu0 0
    %113 = vmatpush2.bf16.msra.mxu0 0
    %114 = vmatprep.subr.bf16.mxu0 0
    %115 = vmatpush2.bf16.msra.mxu0 0
    %116 = vmatprep.subr.bf16.mxu0 0
    %117 = vmatpush2.bf16.msra.mxu0 0
    %118 = vmatprep.subr.bf16.mxu0 0
    %119 = vmatpush2.bf16.msra.mxu0 0
    %120 = vmatprep.mubr.bf16.mxu0 0
    %121 = vmatmul.mubr.bf16.gmra.mxu0 %v38
    %v122 = vpop.f32.mrf.mxu0
    %v123 = vadd.f32 0.0, %v122
    %v124 = vpop.f32.mrf.mxu0
    %v125 = vpop.f32.mrf.mxu0
    %v126 = vadd.f32 0.0, %v125
    %v127 = vpop.f32.mrf.mxu0
    %128 = vdwg.mxu0
    %v129 = vld [vmem:[%s2] sm:$0xff]
    %v130 = vld [vmem:[%s2 + $0x8] sm:$0xff]
    %132 = vset.pattern.permute.xlu0 0
    %133 = vperm.xlu0 %132, %v129
    %v134 = vpop.permute.xlu0 %133
    %137 = vset.pattern.permute.xlu0 0
    %138 = vperm.xlu0 %137, %v130
    %v139 = vpop.permute.xlu0 %138
    %v141 = vmul.f32 %v123, %v134
    %v142 = vmul.f32 %v126, %v139
    %v143 = vmax.f32 %v141, 0.0
    %v144 = vmax.f32 %v142, 0.0
    %145 = vst [vmem:[#allocation2] sm:$0xff] %v143
    %146 = vst [vmem:[#allocation2 + $0x8] sm:$0xff] %v144
    // Predicated region
    $region14: #{hypergraph_conv.3} parent=1 // pred_check
      _
    $region15: #{hypergraph_conv.3} parent=1 // pred_check_branch
      %148 = sbr.rel (0) target = $region17
    $region16: #{hypergraph_conv.3} parent=1 // pred_region
      %s150 = ssub.s32 256, 256
      %151 = vsyncadd [#allocation3], %s150
      %s152 = sshll.u32 [#allocation2], 4
      %s153 = int_to_ptr.vmem [resolvable:$true] %s152
      %158 = dma.vmem_to_hbm [thread:$0]  %s153, 256, %s3, [#allocation3], 128, 128, 8
    $region17: #{hypergraph_conv.3} parent=1 // pred_fallthru
      _
    // Predicated region
    $region18: #{hypergraph_conv.3} parent=1 // pred_check
      _
    $region19: #{hypergraph_conv.3} parent=1 // pred_check_branch
      %160 = sbr.rel (0) target = $region21
    $region20: #{hypergraph_conv.3} parent=1 // pred_region
      %161 = dma.done [#allocation3], 256
    $region21: #{hypergraph_conv.3} parent=1 // pred_fallthru
      _
    %162 = vsyncpa [#allocation3], 1

// kernel: hypergraph_conv.2
$region0: #{hypergraph_conv.2}
  #allocation0 [shape = 'u32[]', space=smem, size = 0x4, offset = 0x4, fixed_abs, tag = 'smem constant byte address 0x4 - core index']
  #allocation1 [shape = 'u32[144,128]{1,0:T(1,128)}', space=vmem, size = 0x12000, scoped, tag = 'internal scratch']
  #allocation2 [shape = 'f32[128,128]{1,0:T(8,128)}', space=vmem, size = 0x10000, scoped, tag = 'scratch operand']
  %s0 = inlined_call_operand.vmem [shape: bf16[16,128], index: 0, kind: input, shape index: {}]
  %s1 = inlined_call_operand.vmem [shape: bf16[16,128], index: 1, kind: input, shape index: {}]
  %s2 = inlined_call_operand.vmem [shape: f32[128,1], index: 2, kind: input, shape index: {}]
  %s3 = inlined_call_operand.vmem [shape: bf16[128,128], index: 3, kind: input, shape index: {}]
  %s4 = inlined_call_operand.vmem [shape: f32[1,128], index: 4, kind: input, shape index: {}]
  %s5 = inlined_call_operand.vmem [shape: bf16[128,128], index: 5, kind: output, shape index: {}]
  %s6 = sld [smem:[#allocation0]]
  $region38: #{hypergraph_conv.2} parent=0
    _
  %s8 = ssub.s32 1, %s6
  %s9 = scalar_select 0, %s8, %s6
  // Predicated region
  $region2: #{hypergraph_conv.2} parent=0 // pred_check
    _
  $region3: #{hypergraph_conv.2} parent=0 // pred_check_branch
    %11 = sbr.rel (0) target = $region5
  $region4: #{hypergraph_conv.2} parent=0 // pred_region
    _
  $region5: #{hypergraph_conv.2} parent=0 // pred_fallthru
    _
  // Predicated region
  $region6: #{hypergraph_conv.2} parent=0 // pred_check
    _
  $region7: #{hypergraph_conv.2} parent=0 // pred_check_branch
    %13 = sbr.rel (0) target = $region9
  $region8: #{hypergraph_conv.2} parent=0 // pred_region
    _
  $region9: #{hypergraph_conv.2} parent=0 // pred_fallthru
    _
  // Predicated region
  $region10: #{hypergraph_conv.2} parent=0 // pred_check
    _
  $region11: #{hypergraph_conv.2} parent=0 // pred_check_branch
    %15 = sbr.rel (0) target = $region13
  $region12: #{hypergraph_conv.2} parent=0 // pred_region
    _
  $region13: #{hypergraph_conv.2} parent=0 // pred_fallthru
    _
  // Predicated region
  $region14: #{hypergraph_conv.2} parent=0 // pred_check
    _
  $region15: #{hypergraph_conv.2} parent=0 // pred_check_branch
    %17 = sbr.rel (0) target = $region17
  $region16: #{hypergraph_conv.2} parent=0 // pred_region
    _
  $region17: #{hypergraph_conv.2} parent=0 // pred_fallthru
    _
  // Predicated region
  $region18: #{hypergraph_conv.2} parent=0 // pred_check
    _
  $region19: #{hypergraph_conv.2} parent=0 // pred_check_branch
    %19 = sbr.rel (0) target = $region21
  $region20: #{hypergraph_conv.2} parent=0 // pred_region
    _
  $region21: #{hypergraph_conv.2} parent=0 // pred_fallthru
    _
  %p21 = scmp.eq.s32.totalorder 0, 0
  // Predicated region
  $region22: #{hypergraph_conv.2} parent=0 // pred_check
    %p22 = pneg %p21
  $region23: #{hypergraph_conv.2} parent=0 // pred_check_branch
    %24 = sbr.rel (%p22) target = $region25
  $region24: #{hypergraph_conv.2} parent=0 // pred_region
    %25 = vst [vmem:[#allocation2] sm:$0xff] 0.0
    %26 = vst [vmem:[#allocation2 + $0x8] sm:$0xff] 0.0
    %27 = vst [vmem:[#allocation2 + $0x10] sm:$0xff] 0.0
    %28 = vst [vmem:[#allocation2 + $0x18] sm:$0xff] 0.0
    %29 = vst [vmem:[#allocation2 + $0x20] sm:$0xff] 0.0
    %30 = vst [vmem:[#allocation2 + $0x28] sm:$0xff] 0.0
    %31 = vst [vmem:[#allocation2 + $0x30] sm:$0xff] 0.0
    %32 = vst [vmem:[#allocation2 + $0x38] sm:$0xff] 0.0
    %33 = vst [vmem:[#allocation2 + $0x40] sm:$0xff] 0.0
    %34 = vst [vmem:[#allocation2 + $0x48] sm:$0xff] 0.0
    %35 = vst [vmem:[#allocation2 + $0x50] sm:$0xff] 0.0
    %36 = vst [vmem:[#allocation2 + $0x58] sm:$0xff] 0.0
    %37 = vst [vmem:[#allocation2 + $0x60] sm:$0xff] 0.0
    %38 = vst [vmem:[#allocation2 + $0x68] sm:$0xff] 0.0
    %39 = vst [vmem:[#allocation2 + $0x70] sm:$0xff] 0.0
    %40 = vst [vmem:[#allocation2 + $0x78] sm:$0xff] 0.0
  $region25: #{hypergraph_conv.2} parent=0 // pred_fallthru
    _
  %v41 = vld [vmem:[#allocation2] sm:$0xff]
  %v42 = vld [vmem:[#allocation2 + $0x8] sm:$0xff]
  %v43 = vld [vmem:[#allocation2 + $0x10] sm:$0xff]
  %v44 = vld [vmem:[#allocation2 + $0x18] sm:$0xff]
  %v45 = vld [vmem:[#allocation2 + $0x20] sm:$0xff]
  %v46 = vld [vmem:[#allocation2 + $0x28] sm:$0xff]
  %v47 = vld [vmem:[#allocation2 + $0x30] sm:$0xff]
  %v48 = vld [vmem:[#allocation2 + $0x38] sm:$0xff]
  %v49 = vld [vmem:[#allocation2 + $0x40] sm:$0xff]
  %v50 = vld [vmem:[#allocation2 + $0x48] sm:$0xff]
  %v51 = vld [vmem:[#allocation2 + $0x50] sm:$0xff]
  %v52 = vld [vmem:[#allocation2 + $0x58] sm:$0xff]
  %v53 = vld [vmem:[#allocation2 + $0x60] sm:$0xff]
  %v54 = vld [vmem:[#allocation2 + $0x68] sm:$0xff]
  %v55 = vld [vmem:[#allocation2 + $0x70] sm:$0xff]
  %v56 = vld [vmem:[#allocation2 + $0x78] sm:$0xff]
  %v57 = vld [vmem:[%s0] sm:$0xf]
  %v58 = vld [vmem:[%s0 + $0x4] sm:$0xf]
  %v59 = vld [vmem:[%s1] sm:$0xf]
  %v60 = vld [vmem:[%s1 + $0x4] sm:$0xf]
  %v63 = vunpack.c.l.b16 %v57
  %v64 = vunpack.c.l.b16 %v58
  %v65 = vpack.c.b16 %v64, %v63
  %67 = vxpose.xlu0.c.b16.start [1/8] %v65, 128
  %68 = vxpose.xlu0.c.b16.cont [2/8] 0, 128
  %69 = vxpose.xlu0.c.b16.cont [3/8] 0, 128
  %70 = vxpose.xlu0.c.b16.cont [4/8] 0, 128
  %71 = vxpose.xlu0.c.b16.cont [5/8] 0, 128
  %72 = vxpose.xlu0.c.b16.cont [6/8] 0, 128
  %73 = vxpose.xlu0.c.b16.cont [7/8] 0, 128
  %74 = vxpose.xlu0.c.b16.end [8/8] 0, 128
  %v75 = vpop.trf.xlu0
  %v76 = vpop.trf.xlu0
  %v77 = vpop.trf.xlu0
  %v78 = vpop.trf.xlu0
  %v79 = vpop.trf.xlu0
  %v80 = vpop.trf.xlu0
  %v81 = vpop.trf.xlu0
  %v82 = vpop.trf.xlu0
  %v85 = vunpack.c.l.b16 %v59
  %v86 = vunpack.c.l.b16 %v60
  %v87 = vpack.c.b16 %v86, %v85
  %vm89 = vcmask 130048
  %v91 = vsel %vm89, %v75, 0
  %v94 = vsel %vm89, %v76, 0
  %v97 = vsel %vm89, %v77, 0
  %v100 = vsel %vm89, %v78, 0
  %v103 = vsel %vm89, %v79, 0
  %v106 = vsel %vm89, %v80, 0
  %v109 = vsel %vm89, %v81, 0
  %v112 = vsel %vm89, %v82, 0
  %114 = vmatprep.subr.bf16.mxu0 0
  %115 = vmatpush1.bf16.msra.mxu0 0
  %116 = vmatprep.subr.bf16.mxu0 0
  %117 = vmatpush1.bf16.msra.mxu0 0
  %118 = vmatprep.subr.bf16.mxu0 0
  %119 = vmatpush1.bf16.msra.mxu0 0
  %120 = vmatprep.subr.bf16.mxu0 0
  %121 = vmatpush1.bf16.msra.mxu0 0
  %122 = vmatprep.subr.bf16.mxu0 0
  %123 = vmatpush1.bf16.msra.mxu0 0
  %124 = vmatprep.subr.bf16.mxu0 0
  %125 = vmatpush1.bf16.msra.mxu0 0
  %126 = vmatprep.subr.bf16.mxu0 0
  %127 = vmatpush1.bf16.msra.mxu0 0
  %128 = vmatprep.subr.bf16.mxu0 0
  %129 = vmatpush1.bf16.msra.mxu0 %v87
  %130 = vmatprep.subr.bf16.mxu0 0
  %131 = vmatpush2.bf16.msra.mxu0 0
  %132 = vmatprep.subr.bf16.mxu0 0
  %133 = vmatpush2.bf16.msra.mxu0 0
  %134 = vmatprep.subr.bf16.mxu0 0
  %135 = vmatpush2.bf16.msra.mxu0 0
  %136 = vmatprep.subr.bf16.mxu0 0
  %137 = vmatpush2.bf16.msra.mxu0 0
  %138 = vmatprep.subr.bf16.mxu0 0
  %139 = vmatpush2.bf16.msra.mxu0 0
  %140 = vmatprep.subr.bf16.mxu0 0
  %141 = vmatpush2.bf16.msra.mxu0 0
  %142 = vmatprep.subr.bf16.mxu0 0
  %143 = vmatpush2.bf16.msra.mxu0 0
  %144 = vmatprep.subr.bf16.mxu0 0
  %145 = vmatpush2.bf16.msra.mxu0 0
  %146 = vmatprep.mubr.bf16.mxu0 0
  %147 = vmatmul.mubr.bf16.gmra.mxu0 %v91
  %v148 = vpop.f32.mrf.mxu0
  %v149 = vadd.f32 0.0, %v148
  %v150 = vpop.f32.mrf.mxu0
  %v151 = vpop.f32.mrf.mxu0
  %v152 = vadd.f32 0.0, %v151
  %v153 = vpop.f32.mrf.mxu0
  %154 = vmatprep.mubr.bf16.mxu0 0
  %155 = vmatmul.mubr.bf16.gmra.mxu0 %v94
  %v156 = vpop.f32.mrf.mxu0
  %v157 = vadd.f32 0.0, %v156
  %v158 = vpop.f32.mrf.mxu0
  %v159 = vpop.f32.mrf.mxu0
  %v160 = vadd.f32 0.0, %v159
  %v161 = vpop.f32.mrf.mxu0
  %162 = vmatprep.mubr.bf16.mxu0 0
  %163 = vmatmul.mubr.bf16.gmra.mxu0 %v97
  %v164 = vpop.f32.mrf.mxu0
  %v165 = vadd.f32 0.0, %v164
  %v166 = vpop.f32.mrf.mxu0
  %v167 = vpop.f32.mrf.mxu0
  %v168 = vadd.f32 0.0, %v167
  %v169 = vpop.f32.mrf.mxu0
  %170 = vmatprep.mubr.bf16.mxu0 0
  %171 = vmatmul.mubr.bf16.gmra.mxu0 %v100
  %v172 = vpop.f32.mrf.mxu0
  %v173 = vadd.f32 0.0, %v172
  %v174 = vpop.f32.mrf.mxu0
  %v175 = vpop.f32.mrf.mxu0
  %v176 = vadd.f32 0.0, %v175
  %v177 = vpop.f32.mrf.mxu0
  %178 = vmatprep.mubr.bf16.mxu0 0
  %179 = vmatmul.mubr.bf16.gmra.mxu0 %v103
  %v180 = vpop.f32.mrf.mxu0
  %v181 = vadd.f32 0.0, %v180
  %v182 = vpop.f32.mrf.mxu0
  %v183 = vpop.f32.mrf.mxu0
  %v184 = vadd.f32 0.0, %v183
  %v185 = vpop.f32.mrf.mxu0
  %186 = vmatprep.mubr.bf16.mxu0 0
  %187 = vmatmul.mubr.bf16.gmra.mxu0 %v106
  %v188 = vpop.f32.mrf.mxu0
  %v189 = vadd.f32 0.0, %v188
  %v190 = vpop.f32.mrf.mxu0
  %v191 = vpop.f32.mrf.mxu0
  %v192 = vadd.f32 0.0, %v191
  %v193 = vpop.f32.mrf.mxu0
  %194 = vmatprep.mubr.bf16.mxu0 0
  %195 = vmatmul.mubr.bf16.gmra.mxu0 %v109
  %v196 = vpop.f32.mrf.mxu0
  %v197 = vadd.f32 0.0, %v196
  %v198 = vpop.f32.mrf.mxu0
  %v199 = vpop.f32.mrf.mxu0
  %v200 = vadd.f32 0.0, %v199
  %v201 = vpop.f32.mrf.mxu0
  %202 = vmatprep.mubr.bf16.mxu0 0
  %203 = vmatmul.mubr.bf16.gmra.mxu0 %v112
  %v204 = vpop.f32.mrf.mxu0
  %v205 = vadd.f32 0.0, %v204
  %v206 = vpop.f32.mrf.mxu0
  %v207 = vpop.f32.mrf.mxu0
  %v208 = vadd.f32 0.0, %v207
  %v209 = vpop.f32.mrf.mxu0
  %210 = vdwg.mxu0
  %v211 = vadd.f32 %v41, %v149
  %v212 = vadd.f32 %v42, %v152
  %v213 = vadd.f32 %v43, %v157
  %v214 = vadd.f32 %v44, %v160
  %v215 = vadd.f32 %v45, %v165
  %v216 = vadd.f32 %v46, %v168
  %v217 = vadd.f32 %v47, %v173
  %v218 = vadd.f32 %v48, %v176
  %v219 = vadd.f32 %v49, %v181
  %v220 = vadd.f32 %v50, %v184
  %v221 = vadd.f32 %v51, %v189
  %v222 = vadd.f32 %v52, %v192
  %v223 = vadd.f32 %v53, %v197
  %v224 = vadd.f32 %v54, %v200
  %v225 = vadd.f32 %v55, %v205
  %v226 = vadd.f32 %v56, %v208
  %227 = vst [vmem:[#allocation2] sm:$0xff] %v211
  %228 = vst [vmem:[#allocation2 + $0x8] sm:$0xff] %v212
  %229 = vst [vmem:[#allocation2 + $0x10] sm:$0xff] %v213
  %230 = vst [vmem:[#allocation2 + $0x18] sm:$0xff] %v214
  %231 = vst [vmem:[#allocation2 + $0x20] sm:$0xff] %v215
  %232 = vst [vmem:[#allocation2 + $0x28] sm:$0xff] %v216
  %233 = vst [vmem:[#allocation2 + $0x30] sm:$0xff] %v217
  %234 = vst [vmem:[#allocation2 + $0x38] sm:$0xff] %v218
  %235 = vst [vmem:[#allocation2 + $0x40] sm:$0xff] %v219
  %236 = vst [vmem:[#allocation2 + $0x48] sm:$0xff] %v220
  %237 = vst [vmem:[#allocation2 + $0x50] sm:$0xff] %v221
  %238 = vst [vmem:[#allocation2 + $0x58] sm:$0xff] %v222
  %239 = vst [vmem:[#allocation2 + $0x60] sm:$0xff] %v223
  %240 = vst [vmem:[#allocation2 + $0x68] sm:$0xff] %v224
  %241 = vst [vmem:[#allocation2 + $0x70] sm:$0xff] %v225
  %242 = vst [vmem:[#allocation2 + $0x78] sm:$0xff] %v226
  // Predicated region
  $region26: #{hypergraph_conv.2} parent=0 // pred_check
    %p243 = pneg %p21
  $region27: #{hypergraph_conv.2} parent=0 // pred_check_branch
    %245 = sbr.rel (%p243) target = $region29
  $region28: #{hypergraph_conv.2} parent=0 // pred_region
    %v246 = vld [vmem:[#allocation2] sm:$0xff]
    %v247 = vld [vmem:[#allocation2 + $0x8] sm:$0xff]
    %v248 = vld [vmem:[#allocation2 + $0x10] sm:$0xff]
    %v249 = vld [vmem:[#allocation2 + $0x18] sm:$0xff]
    %v250 = vld [vmem:[#allocation2 + $0x20] sm:$0xff]
    %v251 = vld [vmem:[#allocation2 + $0x28] sm:$0xff]
    %v252 = vld [vmem:[#allocation2 + $0x30] sm:$0xff]
    %v253 = vld [vmem:[#allocation2 + $0x38] sm:$0xff]
    %v254 = vld [vmem:[#allocation2 + $0x40] sm:$0xff]
    %v255 = vld [vmem:[#allocation2 + $0x48] sm:$0xff]
    %v256 = vld [vmem:[#allocation2 + $0x50] sm:$0xff]
    %v257 = vld [vmem:[#allocation2 + $0x58] sm:$0xff]
    %v258 = vld [vmem:[#allocation2 + $0x60] sm:$0xff]
    %v259 = vld [vmem:[#allocation2 + $0x68] sm:$0xff]
    %v260 = vld [vmem:[#allocation2 + $0x70] sm:$0xff]
    %v261 = vld [vmem:[#allocation2 + $0x78] sm:$0xff]
    %v262 = vld [vmem:[%s2] sm:$0xff]
    %v263 = vld [vmem:[%s2 + $0x8] sm:$0xff]
    %v264 = vld [vmem:[%s2 + $0x10] sm:$0xff]
    %v265 = vld [vmem:[%s2 + $0x18] sm:$0xff]
    %v266 = vld [vmem:[%s2 + $0x20] sm:$0xff]
    %v267 = vld [vmem:[%s2 + $0x28] sm:$0xff]
    %v268 = vld [vmem:[%s2 + $0x30] sm:$0xff]
    %v269 = vld [vmem:[%s2 + $0x38] sm:$0xff]
    %v270 = vld [vmem:[%s2 + $0x40] sm:$0xff]
    %v271 = vld [vmem:[%s2 + $0x48] sm:$0xff]
    %v272 = vld [vmem:[%s2 + $0x50] sm:$0xff]
    %v273 = vld [vmem:[%s2 + $0x58] sm:$0xff]
    %v274 = vld [vmem:[%s2 + $0x60] sm:$0xff]
    %v275 = vld [vmem:[%s2 + $0x68] sm:$0xff]
    %v276 = vld [vmem:[%s2 + $0x70] sm:$0xff]
    %v277 = vld [vmem:[%s2 + $0x78] sm:$0xff]
    %279 = vset.pattern.permute.xlu0 0
    %280 = vperm.xlu0 %279, %v262
    %v281 = vpop.permute.xlu0 %280
    %284 = vset.pattern.permute.xlu0 0
    %285 = vperm.xlu0 %284, %v263
    %v286 = vpop.permute.xlu0 %285
    %289 = vset.pattern.permute.xlu0 0
    %290 = vperm.xlu0 %289, %v264
    %v291 = vpop.permute.xlu0 %290
    %294 = vset.pattern.permute.xlu0 0
    %295 = vperm.xlu0 %294, %v265
    %v296 = vpop.permute.xlu0 %295
    %299 = vset.pattern.permute.xlu0 0
    %300 = vperm.xlu0 %299, %v266
    %v301 = vpop.permute.xlu0 %300
    %304 = vset.pattern.permute.xlu0 0
    %305 = vperm.xlu0 %304, %v267
    %v306 = vpop.permute.xlu0 %305
    %309 = vset.pattern.permute.xlu0 0
    %310 = vperm.xlu0 %309, %v268
    %v311 = vpop.permute.xlu0 %310
    %314 = vset.pattern.permute.xlu0 0
    %315 = vperm.xlu0 %314, %v269
    %v316 = vpop.permute.xlu0 %315
    %319 = vset.pattern.permute.xlu0 0
    %320 = vperm.xlu0 %319, %v270
    %v321 = vpop.permute.xlu0 %320
    %324 = vset.pattern.permute.xlu0 0
    %325 = vperm.xlu0 %324, %v271
    %v326 = vpop.permute.xlu0 %325
    %329 = vset.pattern.permute.xlu0 0
    %330 = vperm.xlu0 %329, %v272
    %v331 = vpop.permute.xlu0 %330
    %334 = vset.pattern.permute.xlu0 0
    %335 = vperm.xlu0 %334, %v273
    %v336 = vpop.permute.xlu0 %335
    %339 = vset.pattern.permute.xlu0 0
    %340 = vperm.xlu0 %339, %v274
    %v341 = vpop.permute.xlu0 %340
    %344 = vset.pattern.permute.xlu0 0
    %345 = vperm.xlu0 %344, %v275
    %v346 = vpop.permute.xlu0 %345
    %349 = vset.pattern.permute.xlu0 0
    %350 = vperm.xlu0 %349, %v276
    %v351 = vpop.permute.xlu0 %350
    %354 = vset.pattern.permute.xlu0 0
    %355 = vperm.xlu0 %354, %v277
    %v356 = vpop.permute.xlu0 %355
    %v358 = vmul.f32 %v246, %v281
    %v359 = vmul.f32 %v247, %v286
    %v360 = vmul.f32 %v248, %v291
    %v361 = vmul.f32 %v249, %v296
    %v362 = vmul.f32 %v250, %v301
    %v363 = vmul.f32 %v251, %v306
    %v364 = vmul.f32 %v252, %v311
    %v365 = vmul.f32 %v253, %v316
    %v366 = vmul.f32 %v254, %v321
    %v367 = vmul.f32 %v255, %v326
    %v368 = vmul.f32 %v256, %v331
    %v369 = vmul.f32 %v257, %v336
    %v370 = vmul.f32 %v258, %v341
    %v371 = vmul.f32 %v259, %v346
    %v372 = vmul.f32 %v260, %v351
    %v373 = vmul.f32 %v261, %v356
    %v374 = vpack.c.bf16 %v359, %v358
    %v375 = vpack.c.bf16 %v361, %v360
    %v376 = vpack.c.bf16 %v363, %v362
    %v377 = vpack.c.bf16 %v365, %v364
    %v378 = vpack.c.bf16 %v367, %v366
    %v379 = vpack.c.bf16 %v369, %v368
    %v380 = vpack.c.bf16 %v371, %v370
    %v381 = vpack.c.bf16 %v373, %v372
    %v382 = vld [vmem:[%s3] sm:$0xf]
    %v383 = vld [vmem:[%s3 + $0x4] sm:$0xf]
    %v384 = vld [vmem:[%s3 + $0x8] sm:$0xf]
    %v385 = vld [vmem:[%s3 + $0xc] sm:$0xf]
    %v386 = vld [vmem:[%s3 + $0x10] sm:$0xf]
    %v387 = vld [vmem:[%s3 + $0x14] sm:$0xf]
    %v388 = vld [vmem:[%s3 + $0x18] sm:$0xf]
    %v389 = vld [vmem:[%s3 + $0x1c] sm:$0xf]
    %v390 = vld [vmem:[%s3 + $0x20] sm:$0xf]
    %v391 = vld [vmem:[%s3 + $0x24] sm:$0xf]
    %v392 = vld [vmem:[%s3 + $0x28] sm:$0xf]
    %v393 = vld [vmem:[%s3 + $0x2c] sm:$0xf]
    %v394 = vld [vmem:[%s3 + $0x30] sm:$0xf]
    %v395 = vld [vmem:[%s3 + $0x34] sm:$0xf]
    %v396 = vld [vmem:[%s3 + $0x38] sm:$0xf]
    %v397 = vld [vmem:[%s3 + $0x3c] sm:$0xf]
    %v398 = vld [vmem:[%s4] sm:$0x1]
    %v400 = vlaneseq
    %v401 = vshrl.u32 %v400, 7
    %v402 = vsub.s32 0, %v401
    %v403 = vrot.slane %v398, %v402
    %v421 = vunpack.c.l.b16 %v382
    %v422 = vunpack.c.l.b16 %v383
    %v423 = vunpack.c.l.b16 %v384
    %v424 = vunpack.c.l.b16 %v385
    %v425 = vunpack.c.l.b16 %v386
    %v426 = vunpack.c.l.b16 %v387
    %v427 = vunpack.c.l.b16 %v388
    %v428 = vunpack.c.l.b16 %v389
    %v429 = vunpack.c.l.b16 %v390
    %v430 = vunpack.c.l.b16 %v391
    %v431 = vunpack.c.l.b16 %v392
    %v432 = vunpack.c.l.b16 %v393
    %v433 = vunpack.c.l.b16 %v394
    %v434 = vunpack.c.l.b16 %v395
    %v435 = vunpack.c.l.b16 %v396
    %v436 = vunpack.c.l.b16 %v397
    %v437 = vpack.c.b16 %v422, %v421
    %v438 = vpack.c.b16 %v424, %v423
    %v439 = vpack.c.b16 %v426, %v425
    %v440 = vpack.c.b16 %v428, %v427
    %v441 = vpack.c.b16 %v430, %v429
    %v442 = vpack.c.b16 %v432, %v431
    %v443 = vpack.c.b16 %v434, %v433
    %v444 = vpack.c.b16 %v436, %v435
    %453 = vmatprep.subr.bf16.mxu0 0
    %454 = vmatpush1.bf16.msra.mxu0 %v444
    %455 = vmatprep.subr.bf16.mxu0 0
    %456 = vmatpush1.bf16.msra.mxu0 %v443
    %457 = vmatprep.subr.bf16.mxu0 0
    %458 = vmatpush1.bf16.msra.mxu0 %v442
    %459 = vmatprep.subr.bf16.mxu0 0
    %460 = vmatpush1.bf16.msra.mxu0 %v441
    %461 = vmatprep.subr.bf16.mxu0 0
    %462 = vmatpush1.bf16.msra.mxu0 %v440
    %463 = vmatprep.subr.bf16.mxu0 0
    %464 = vmatpush1.bf16.msra.mxu0 %v439
    %465 = vmatprep.subr.bf16.mxu0 0
    %466 = vmatpush1.bf16.msra.mxu0 %v438
    %467 = vmatprep.subr.bf16.mxu0 0
    %468 = vmatpush1.bf16.msra.mxu0 %v437
    %469 = vmatprep.subr.bf16.mxu0 0
    %470 = vmatpush2.bf16.msra.mxu0 0
    %471 = vmatprep.subr.bf16.mxu0 0
    %472 = vmatpush2.bf16.msra.mxu0 0
    %473 = vmatprep.subr.bf16.mxu0 0
    %474 = vmatpush2.bf16.msra.mxu0 0
    %475 = vmatprep.subr.bf16.mxu0 0
    %476 = vmatpush2.bf16.msra.mxu0 0
    %477 = vmatprep.subr.bf16.mxu0 0
    %478 = vmatpush2.bf16.msra.mxu0 0
    %479 = vmatprep.subr.bf16.mxu0 0
    %480 = vmatpush2.bf16.msra.mxu0 0
    %481 = vmatprep.subr.bf16.mxu0 0
    %482 = vmatpush2.bf16.msra.mxu0 0
    %483 = vmatprep.subr.bf16.mxu0 0
    %484 = vmatpush2.bf16.msra.mxu0 0
    %485 = vmatprep.mubr.bf16.mxu0 0
    %486 = vmatmul.mubr.bf16.gmra.mxu0 %v374
    %v487 = vpop.f32.mrf.mxu0
    %v488 = vadd.f32 %v403, %v487
    %v489 = vpop.f32.mrf.mxu0
    %v490 = vpop.f32.mrf.mxu0
    %v491 = vadd.f32 %v403, %v490
    %v492 = vpop.f32.mrf.mxu0
    %493 = vmatprep.mubr.bf16.mxu0 0
    %494 = vmatmul.mubr.bf16.gmra.mxu0 %v375
    %v495 = vpop.f32.mrf.mxu0
    %v496 = vadd.f32 %v403, %v495
    %v497 = vpop.f32.mrf.mxu0
    %v498 = vpop.f32.mrf.mxu0
    %v499 = vadd.f32 %v403, %v498
    %v500 = vpop.f32.mrf.mxu0
    %501 = vmatprep.mubr.bf16.mxu0 0
    %502 = vmatmul.mubr.bf16.gmra.mxu0 %v376
    %v503 = vpop.f32.mrf.mxu0
    %v504 = vadd.f32 %v403, %v503
    %v505 = vpop.f32.mrf.mxu0
    %v506 = vpop.f32.mrf.mxu0
    %v507 = vadd.f32 %v403, %v506
    %v508 = vpop.f32.mrf.mxu0
    %509 = vmatprep.mubr.bf16.mxu0 0
    %510 = vmatmul.mubr.bf16.gmra.mxu0 %v377
    %v511 = vpop.f32.mrf.mxu0
    %v512 = vadd.f32 %v403, %v511
    %v513 = vpop.f32.mrf.mxu0
    %v514 = vpop.f32.mrf.mxu0
    %v515 = vadd.f32 %v403, %v514
    %v516 = vpop.f32.mrf.mxu0
    %517 = vmatprep.mubr.bf16.mxu0 0
    %518 = vmatmul.mubr.bf16.gmra.mxu0 %v378
    %v519 = vpop.f32.mrf.mxu0
    %v520 = vadd.f32 %v403, %v519
    %v521 = vpop.f32.mrf.mxu0
    %v522 = vpop.f32.mrf.mxu0
    %v523 = vadd.f32 %v403, %v522
    %v524 = vpop.f32.mrf.mxu0
    %525 = vmatprep.mubr.bf16.mxu0 0
    %526 = vmatmul.mubr.bf16.gmra.mxu0 %v379
    %v527 = vpop.f32.mrf.mxu0
    %v528 = vadd.f32 %v403, %v527
    %v529 = vpop.f32.mrf.mxu0
    %v530 = vpop.f32.mrf.mxu0
    %v531 = vadd.f32 %v403, %v530
    %v532 = vpop.f32.mrf.mxu0
    %533 = vmatprep.mubr.bf16.mxu0 0
    %534 = vmatmul.mubr.bf16.gmra.mxu0 %v380
    %v535 = vpop.f32.mrf.mxu0
    %v536 = vadd.f32 %v403, %v535
    %v537 = vpop.f32.mrf.mxu0
    %v538 = vpop.f32.mrf.mxu0
    %v539 = vadd.f32 %v403, %v538
    %v540 = vpop.f32.mrf.mxu0
    %541 = vmatprep.mubr.bf16.mxu0 0
    %542 = vmatmul.mubr.bf16.gmra.mxu0 %v381
    %v543 = vpop.f32.mrf.mxu0
    %v544 = vadd.f32 %v403, %v543
    %v545 = vpop.f32.mrf.mxu0
    %v546 = vpop.f32.mrf.mxu0
    %v547 = vadd.f32 %v403, %v546
    %v548 = vpop.f32.mrf.mxu0
    %549 = vdwg.mxu0
    %v550 = vpack.c.bf16 %v491, %v488
    %v551 = vpack.c.bf16 %v499, %v496
    %v552 = vpack.c.bf16 %v507, %v504
    %v553 = vpack.c.bf16 %v515, %v512
    %v554 = vpack.c.bf16 %v523, %v520
    %v555 = vpack.c.bf16 %v531, %v528
    %v556 = vpack.c.bf16 %v539, %v536
    %v557 = vpack.c.bf16 %v547, %v544
    %v566 = vunpack.c.l.b16 %v550
    %v567 = vunpack.c.h.b16 %v550
    %v568 = vunpack.c.l.b16 %v551
    %v569 = vunpack.c.h.b16 %v551
    %v570 = vunpack.c.l.b16 %v552
    %v571 = vunpack.c.h.b16 %v552
    %v572 = vunpack.c.l.b16 %v553
    %v573 = vunpack.c.h.b16 %v553
    %v574 = vunpack.c.l.b16 %v554
    %v575 = vunpack.c.h.b16 %v554
    %v576 = vunpack.c.l.b16 %v555
    %v577 = vunpack.c.h.b16 %v555
    %v578 = vunpack.c.l.b16 %v556
    %v579 = vunpack.c.h.b16 %v556
    %v580 = vunpack.c.l.b16 %v557
    %v581 = vunpack.c.h.b16 %v557
    %v582 = vpack.c.b16 %v566, %v566
    %v583 = vpack.c.b16 %v567, %v567
    %v584 = vpack.c.b16 %v568, %v568
    %v585 = vpack.c.b16 %v569, %v569
    %v586 = vpack.c.b16 %v570, %v570
    %v587 = vpack.c.b16 %v571, %v571
    %v588 = vpack.c.b16 %v572, %v572
    %v589 = vpack.c.b16 %v573, %v573
    %v590 = vpack.c.b16 %v574, %v574
    %v591 = vpack.c.b16 %v575, %v575
    %v592 = vpack.c.b16 %v576, %v576
    %v593 = vpack.c.b16 %v577, %v577
    %v594 = vpack.c.b16 %v578, %v578
    %v595 = vpack.c.b16 %v579, %v579
    %v596 = vpack.c.b16 %v580, %v580
    %v597 = vpack.c.b16 %v581, %v581
    %614 = vst [vmem:[%s5] sm:$0xf] %v582
    %615 = vst [vmem:[%s5 + $0x4] sm:$0xf] %v583
    %616 = vst [vmem:[%s5 + $0x8] sm:$0xf] %v584
    %617 = vst [vmem:[%s5 + $0xc] sm:$0xf] %v585
    %618 = vst [vmem:[%s5 + $0x10] sm:$0xf] %v586
    %619 = vst [vmem:[%s5 + $0x14] sm:$0xf] %v587
    %620 = vst [vmem:[%s5 + $0x18] sm:$0xf] %v588
    %621 = vst [vmem:[%s5 + $0x1c] sm:$0xf] %v589
    %622 = vst [vmem:[%s5 + $0x20] sm:$0xf] %v590
    %623 = vst [vmem:[%s5 + $0x24] sm:$0xf] %v591
    %624 = vst [vmem:[%s5 + $0x28] sm:$0xf] %v592
    %625 = vst [vmem:[%s5 + $0x2c] sm:$0xf] %v593
    %626 = vst [vmem:[%s5 + $0x30] sm:$0xf] %v594
    %627 = vst [vmem:[%s5 + $0x34] sm:$0xf] %v595
    %628 = vst [vmem:[%s5 + $0x38] sm:$0xf] %v596
    %629 = vst [vmem:[%s5 + $0x3c] sm:$0xf] %v597
  $region29: #{hypergraph_conv.2} parent=0 // pred_fallthru
    _
  // Predicated region
  $region30: #{hypergraph_conv.2} parent=0 // pred_check
    _
  $region31: #{hypergraph_conv.2} parent=0 // pred_check_branch
    %631 = sbr.rel (0) target = $region33
  $region32: #{hypergraph_conv.2} parent=0 // pred_region
    _
  $region33: #{hypergraph_conv.2} parent=0 // pred_fallthru
    _
  // Predicated region
  $region34: #{hypergraph_conv.2} parent=0 // pred_check
    _
  $region35: #{hypergraph_conv.2} parent=0 // pred_check_branch
    %633 = sbr.rel (0) target = $region37
  $region36: #{hypergraph_conv.2} parent=0 // pred_region
    _
  $region37: #{hypergraph_conv.2} parent=0 // pred_fallthru
    _

</llo_original>
